<compile_context>
chip_gen: v5e
topology: v5e:2x2
jax: 0.10.0
libtpu: 0.0.40
codegen_flags: <defaults>
</compile_context>

<pallas_src>
import jax
import jax.numpy as jnp
from jax.experimental import pallas as pl
from jax.experimental.pallas import tpu as pltpu


# VMEM working-set budget used to cap tile sizes.  24 MiB is safe on every
# generation (v7x: 64 MiB physical / 32 MiB scoped default; v5e/v6e: 128 MiB),
# leaving headroom for double-buffering and compiler-internal scratch.
_VMEM_BUDGET_BYTES = 24 * 1024 * 1024


def _linear_kernel(x_ref, w_ref, b_ref, o_ref, acc_ref):
    """One (tb, tn) output tile of x @ W + b, with W already in (D, N) layout.

    x_ref:   (tb, tk)  activation tile
    w_ref:   (tk, tn)  weight tile (D, N) layout -> plain NN matmul, no transpose
    b_ref:   (1, tn)   f32 bias row
    o_ref:   (tb, tn)  output tile (written once, on the last K step)
    acc_ref: (tb, tn)  f32 VMEM accumulator (P3) -> K-partials never round
                       through the output dtype.
    """
    k = pl.program_id(2)

    lhs = x_ref[...]
    rhs = w_ref[...]
    if lhs.dtype != rhs.dtype:
        # Homogeneous (e.g. bf16 x bf16) MXU matmul; accumulation stays f32.
        lhs = lhs.astype(rhs.dtype)

    partial = jnp.dot(lhs, rhs, preferred_element_type=jnp.float32)

    @pl.when(k == 0)
    def _():
        acc_ref[...] = partial

    @pl.when(k > 0)
    def _():
        acc_ref[...] += partial

    @pl.when(k == pl.num_programs(2) - 1)
    def _():
        o_ref[...] = (acc_ref[...] + b_ref[...].astype(jnp.float32)).astype(o_ref.dtype)


def _footprint_bytes(tb, tk, tn, x_isize, w_isize, out_isize):
    # BlockSpec double-buffers each pipelined operand; the f32 accumulator
    # scratch is single-buffered.
    blocks = tb * tk * x_isize + tk * tn * w_isize + tn * 4 + tb * tn * out_isize
    return 2 * blocks + tb * tn * 4


def _pick_tiles(B, D, N, x_isize, w_isize, out_isize, budget):
    """Start from whole-array tiles and halve K (then N) until we fit VMEM."""
    tb, tk, tn = B, D, N

    def halvable(t):
        # Halving keeps the tile a multiple of 128 and a divisor of the full dim.
        return t % 256 == 0

    while _footprint_bytes(tb, tk, tn, x_isize, w_isize, out_isize) > budget:
        if halvable(tk):      # split the reduction axis first (stays last / "arbitrary")
            tk //= 2
        elif halvable(tn):
            tn //= 2
        else:
            break
    return tb, tk, tn


def prepare_params(weight, bias, *, weight_dtype=jnp.bfloat16):
    """One-time, at-rest parameter prep (do NOT call per forward):

    * (N, D) -> (D, N) relayout: plain NN contraction in the kernel, rhs
      lane-dense in N, guarantees no in-kernel transpose of the weight tile.
    * weight stored bf16: halves the dominant HBM traffic for this layer.
    * bias kept f32 (tiny) and reshaped to a (1, N) row.
    """
    w_dn = jnp.asarray(weight).T.astype(weight_dtype)
    b_row = jnp.asarray(bias).reshape(1, -1).astype(jnp.float32)
    return w_dn, b_row


def logistic_regression_forward(x, w_dn, b_row, *, tb=None, tn=None, tk=None,
                                vmem_budget_bytes=_VMEM_BUDGET_BYTES):
    """x: (B, ...) flattened to (B, D).  w_dn: (D, N).  b_row: (1, N) f32."""
    B = x.shape[0]
    x2d = x.reshape(B, -1)                     # same semantics as torch .view(B, -1)
    D, N = w_dn.shape
    assert x2d.shape[1] == D, (x2d.shape, w_dn.shape)
    assert b_row.shape == (1, N), b_row.shape

    out_dtype = x.dtype
    out_isize = jnp.dtype(out_dtype).itemsize
    auto_tb, auto_tk, auto_tn = _pick_tiles(
        B, D, N, x2d.dtype.itemsize, w_dn.dtype.itemsize, out_isize,
        vmem_budget_bytes)
    tb = auto_tb if tb is None else tb
    tk = auto_tk if tk is None else tk
    tn = auto_tn if tn is None else tn
    assert B % tb == 0 and D % tk == 0 and N % tn == 0, (tb, tk, tn)

    grid = (B // tb, N // tn, D // tk)         # reduction axis (K) last
    footprint = _footprint_bytes(tb, tk, tn, x2d.dtype.itemsize,
                                 w_dn.dtype.itemsize, out_isize)
    # Never over-request VMEM (v7x has only 64 MiB physical).
    vmem_limit = min(48 * 1024 * 1024, max(2 * footprint, 16 * 1024 * 1024))

    kernel = pl.pallas_call(
        _linear_kernel,
        out_shape=jax.ShapeDtypeStruct((B, N), out_dtype),
        grid_spec=pltpu.PrefetchScalarGridSpec(
            num_scalar_prefetch=0,
            grid=grid,
            in_specs=[
                pl.BlockSpec((tb, tk), lambda i, j, k: (i, k)),   # x tile
                pl.BlockSpec((tk, tn), lambda i, j, k: (k, j)),   # weight (D, N) tile
                pl.BlockSpec((1, tn), lambda i, j, k: (0, j)),    # bias row
            ],
            out_specs=pl.BlockSpec((tb, tn), lambda i, j, k: (i, j)),
            scratch_shapes=[pltpu.VMEM((tb, tn), jnp.float32)],
        ),
        compiler_params=pltpu.CompilerParams(
            # M/N tiles shard across the two TensorCores on v7x once the
            # caller batches; no-op (and harmless) on single-TC v5e/v6e.
            dimension_semantics=("parallel", "parallel", "arbitrary"),
            vmem_limit_bytes=vmem_limit,
        ),
    )
    # TODO(synk): at B=8 this is GEMV-shaped (<=6% MXU row utilization); real
    # throughput needs caller-level batching to M >= 128 (or fusing this layer
    # into the producer of x) - in-kernel work is already at the floor here.
    return kernel(x2d, w_dn, b_row)


if __name__ == "__main__":
    # Small shapes implied by the module: NCHW images flattened to D = C*H*W.
    B, C, H, W = 8, 4, 16, 16
    input_dim = C * H * W        # 1024
    output_dim = 128             # lane-dense output

    key = jax.random.PRNGKey(0)
    kx, kw, kb = jax.random.split(key, 3)

    x = jax.random.normal(kx, (B, C, H, W), dtype=jnp.float32)

    # Deterministic init mimicking torch.nn.Linear default: U(-1/sqrt(D), 1/sqrt(D))
    bound = 1.0 / (input_dim ** 0.5)
    weight = jax.random.uniform(
        kw, (output_dim, input_dim), minval=-bound, maxval=bound, dtype=jnp.float32
    )
    bias = jax.random.uniform(
        kb, (output_dim,), minval=-bound, maxval=bound, dtype=jnp.float32
    )

    # One-time, at-rest param prep: (N, D) -> (D, N) relayout + bf16 weight.
    w_dn, b_row = prepare_params(weight, bias)

    out = logistic_regression_forward(x, w_dn, b_row)
    out = jax.block_until_ready(out)
    assert out.shape == (B, output_dim)
    assert out.dtype == x.dtype

    x2d = x.reshape(B, -1)
    # Tight check vs an XLA dot using the same bf16 weights / f32 accumulation.
    ref_q = jnp.dot(x2d.astype(w_dn.dtype), w_dn,
                    preferred_element_type=jnp.float32) + b_row
    assert jnp.allclose(out, ref_q, atol=1e-3, rtol=1e-3)
    # Relaxed check vs the full-f32 PyTorch-equivalent reference (difference is
    # only the bf16 weight/activation quantization; accumulation stays f32).
    ref_f32 = x2d @ weight.T + bias
    assert jnp.allclose(out, ref_f32, atol=3e-2, rtol=3e-2)

    print("KERNEL_OK")
</pallas_src>

<mosaic_0001>
module attributes {stable_mosaic.version = 11 : i64} {
  func.func @_linear_kernel(%arg0: i32, %arg1: i32, %arg2: i32, %arg3: memref<8x1024xf32, #tpu.memory_space<vmem>>, %arg4: memref<1024x128xbf16, #tpu.memory_space<vmem>>, %arg5: memref<1x128xf32, #tpu.memory_space<vmem>>, %arg6: memref<8x128xf32, #tpu.memory_space<vmem>>, %arg7: memref<8x128xf32, #tpu.memory_space<vmem>>) attributes {dimension_semantics = [#tpu.dimension_semantics<parallel>, #tpu.dimension_semantics<parallel>, #tpu.dimension_semantics<arbitrary>], iteration_bounds = array<i64: 1, 1, 1>, scalar_prefetch = 0 : i64, scratch_operands = 1 : i64, tpu.core_type = #tpu.core_type<tc>, window_params = [{transform_indices = @transform_0, window_bounds = array<i64: 8, 1024>}, {transform_indices = @transform_1, window_bounds = array<i64: 1024, 128>}, {transform_indices = @transform_2, window_bounds = array<i64: 1, 128>}, {transform_indices = @transform_3, window_bounds = array<i64: 8, 128>}]} {
    %c0 = arith.constant 0 : index
    %c0_0 = arith.constant 0 : index
    %0 = vector.load %arg3[%c0, %c0_0] : memref<8x1024xf32, #tpu.memory_space<vmem>>, vector<8x1024xf32>
    %c0_1 = arith.constant 0 : index
    %c0_2 = arith.constant 0 : index
    %1 = vector.load %arg4[%c0_1, %c0_2] : memref<1024x128xbf16, #tpu.memory_space<vmem>>, vector<1024x128xbf16>
    %2 = arith.truncf %0 : vector<8x1024xf32> to vector<8x1024xbf16>
    %cst = arith.constant dense<0.000000e+00> : vector<8x128xf32>
    %3 = tpu.matmul %2, %1, %cst {dimension_numbers = #tpu.dot_dimension_numbers<[1], [0], [0], [1], [0, 0, 1, 1], [], []>} : vector<8x1024xbf16>, vector<1024x128xbf16>, vector<8x128xf32> -> vector<8x128xf32>
    %c0_i32 = arith.constant 0 : i32
    %4 = arith.cmpi eq, %arg2, %c0_i32 : i32
    %5 = arith.extui %4 : i1 to i32
    %c0_i32_3 = arith.constant 0 : i32
    %6 = arith.cmpi ne, %5, %c0_i32_3 : i32
    scf.if %6 {
      %c0_8 = arith.constant 0 : index
      %c0_9 = arith.constant 0 : index
      %13 = vector.load %arg7[%c0_8, %c0_9] : memref<8x128xf32, #tpu.memory_space<vmem>>, vector<8x128xf32>
      tpu.vector_store %arg7[%c0_8, %c0_9], %3 {strides = array<i32>} : memref<8x128xf32, #tpu.memory_space<vmem>>, vector<8x128xf32>,
    } else {
    }
    %c0_i32_4 = arith.constant 0 : i32
    %7 = arith.cmpi sgt, %arg2, %c0_i32_4 : i32
    %8 = arith.extui %7 : i1 to i32
    %c0_i32_5 = arith.constant 0 : i32
    %9 = arith.cmpi ne, %8, %c0_i32_5 : i32
    scf.if %9 {
      %c0_8 = arith.constant 0 : index
      %c0_9 = arith.constant 0 : index
      %13 = vector.load %arg7[%c0_8, %c0_9] : memref<8x128xf32, #tpu.memory_space<vmem>>, vector<8x128xf32>
      %14 = arith.addf %13, %3 : vector<8x128xf32>
      %c0_10 = arith.constant 0 : index
      %c0_11 = arith.constant 0 : index
      %15 = vector.load %arg7[%c0_10, %c0_11] : memref<8x128xf32, #tpu.memory_space<vmem>>, vector<8x128xf32>
      tpu.vector_store %arg7[%c0_10, %c0_11], %14 {strides = array<i32>} : memref<8x128xf32, #tpu.memory_space<vmem>>, vector<8x128xf32>,
    } else {
    }
    %c0_i32_6 = arith.constant 0 : i32
    %10 = arith.cmpi eq, %arg2, %c0_i32_6 : i32
    %11 = arith.extui %10 : i1 to i32
    %c0_i32_7 = arith.constant 0 : i32
    %12 = arith.cmpi ne, %11, %c0_i32_7 : i32
    scf.if %12 {
      %c0_8 = arith.constant 0 : index
      %c0_9 = arith.constant 0 : index
      %13 = vector.load %arg7[%c0_8, %c0_9] : memref<8x128xf32, #tpu.memory_space<vmem>>, vector<8x128xf32>
      %c0_10 = arith.constant 0 : index
      %c0_11 = arith.constant 0 : index
      %14 = vector.load %arg5[%c0_10, %c0_11] : memref<1x128xf32, #tpu.memory_space<vmem>>, vector<1x128xf32>
      %15 = vector.broadcast %14 : vector<1x128xf32> to vector<8x128xf32>
      %16 = arith.addf %13, %15 : vector<8x128xf32>
      %c0_12 = arith.constant 0 : index
      %c0_13 = arith.constant 0 : index
      %17 = vector.load %arg6[%c0_12, %c0_13] : memref<8x128xf32, #tpu.memory_space<vmem>>, vector<8x128xf32>
      tpu.vector_store %arg6[%c0_12, %c0_13], %16 {strides = array<i32>} : memref<8x128xf32, #tpu.memory_space<vmem>>, vector<8x128xf32>,
    } else {
    }
    return
  }
  func.func @transform_0(%arg0: i32, %arg1: i32, %arg2: i32) -> (i32, i32) {
    %c0_i32 = arith.constant 0 : i32
    return %arg0, %arg2 : i32, i32
  }
  func.func @transform_1(%arg0: i32, %arg1: i32, %arg2: i32) -> (i32, i32) {
    %c0_i32 = arith.constant 0 : i32
    return %arg2, %arg1 : i32, i32
  }
  func.func @transform_2(%arg0: i32, %arg1: i32, %arg2: i32) -> (i32, i32) {
    %c0_i32 = arith.constant 0 : i32
    %c0_i32_0 = arith.constant 0 : i32
    return %c0_i32, %arg1 : i32, i32
  }
  func.func @transform_3(%arg0: i32, %arg1: i32, %arg2: i32) -> (i32, i32) {
    %c0_i32 = arith.constant 0 : i32
    return %arg0, %arg1 : i32, i32
  }
}

</mosaic_0001>

<llo_original>
// kernel: tpu_custom_call.1
$region0: #{tpu_custom_call.1}
  #allocation0 [shape = 'u32[]', space=smem, size = 0x4, offset = 0x4, fixed_abs, tag = 'smem constant byte address 0x4 - core index']
  #allocation1 [shape = 'u32[72,128]{1,0:T(1,128)}', space=vmem, size = 0x9000, scoped, tag = 'internal scratch']
  #allocation2 [shape = 'f32[8,128]{1,0:T(8,128)}', space=vmem, size = 0x1000, scoped, tag = 'scratch operand']
  %s0 = inlined_call_operand.hbm [shape: f32[8,1024], index: 0, kind: input, shape index: {}]
  %s1 = inlined_call_operand.hbm [shape: bf16[1024,128], index: 1, kind: input, shape index: {}]
  %s2 = inlined_call_operand.vmem [shape: f32[1,128], index: 2, kind: input, shape index: {}]
  %s3 = inlined_call_operand.hbm [shape: f32[8,128], index: 3, kind: output, shape index: {}]
  %s4 = sld [smem:[#allocation0]]
  $region42: #{tpu_custom_call.1} parent=0
    _
  %s6 = ssub.s32 1, %s4
  %s7 = scalar_select 0, %s6, %s4
  $region1: #{tpu_custom_call.1} parent=0
    #allocation3 [shape = 'u8[32768]{0}', space=vmem, size = 0x8000, scoped, tag = 'input window, operand 0, single buffered']
    #allocation4 [shape = 's32[1]{0}', space=sflag, size = 0x4, scoped, tag = 'scoped memory for tpu_custom_call.1']
    #allocation5 [shape = 's32[1]{0}', space=sflag, size = 0x4, scoped, tag = 'scoped memory for tpu_custom_call.1']
    #allocation6 [shape = 'u8[262144]{0}', space=vmem, size = 0x40000, scoped, tag = 'input window, operand 1, single buffered']
    #allocation7 [shape = 's32[1]{0}', space=sflag, size = 0x4, scoped, tag = 'scoped memory for tpu_custom_call.1']
    #allocation8 [shape = 'u8[4096]{0}', space=vmem, size = 0x1000, scoped, tag = 'output window, operand 0, single buffered']
    %8 = vsyncpa [#allocation4], 0
    %9 = vsyncpa [#allocation7], 0
    %10 = vsyncpa [#allocation5], 0
    // Predicated region
    $region2: #{tpu_custom_call.1} parent=1 // pred_check
      _
    $region3: #{tpu_custom_call.1} parent=1 // pred_check_branch
      %12 = sbr.rel (0) target = $region5
    $region4: #{tpu_custom_call.1} parent=1 // pred_region
      %14 = vsyncadd [#allocation4], 0
      %s16 = sshll.u32 %s0, 4
      %s17 = int_to_ptr.hbm [resolvable:$true] %s16
      %s18 = sshll.u32 [#allocation3], 4
      %s19 = int_to_ptr.vmem [resolvable:$true] %s18
      %21 = dma.hbm_to_vmem [thread:$0]  %s17, 1024, %s19, [#allocation4]
    $region5: #{tpu_custom_call.1} parent=1 // pred_fallthru
      _
    // Predicated region
    $region6: #{tpu_custom_call.1} parent=1 // pred_check
      _
    $region7: #{tpu_custom_call.1} parent=1 // pred_check_branch
      %23 = sbr.rel (0) target = $region9
    $region8: #{tpu_custom_call.1} parent=1 // pred_region
      %25 = vsyncadd [#allocation7], 0
      %s26 = sshll.u32 %s1, 4
      %s27 = int_to_ptr.hbm [resolvable:$true] %s26
      %s28 = sshll.u32 [#allocation6], 4
      %s29 = int_to_ptr.vmem [resolvable:$true] %s28
      %34 = dma.hbm_to_vmem [thread:$0]  %s27, 8192, %s29, [#allocation7], 64, 64, 4
    $region9: #{tpu_custom_call.1} parent=1 // pred_fallthru
      _
    // Predicated region
    $region10: #{tpu_custom_call.1} parent=1 // pred_check
      _
    $region11: #{tpu_custom_call.1} parent=1 // pred_check_branch
      %36 = sbr.rel (0) target = $region13
    $region12: #{tpu_custom_call.1} parent=1 // pred_region
      _
    $region13: #{tpu_custom_call.1} parent=1 // pred_fallthru
      _
    // Predicated region
    $region14: #{tpu_custom_call.1} parent=1 // pred_check
      _
    $region15: #{tpu_custom_call.1} parent=1 // pred_check_branch
      %38 = sbr.rel (0) target = $region17
    $region16: #{tpu_custom_call.1} parent=1 // pred_region
      %40 = dma.done [#allocation4], 1024
    $region17: #{tpu_custom_call.1} parent=1 // pred_fallthru
      _
    // Predicated region
    $region18: #{tpu_custom_call.1} parent=1 // pred_check
      _
    $region19: #{tpu_custom_call.1} parent=1 // pred_check_branch
      %42 = sbr.rel (0) target = $region21
    $region20: #{tpu_custom_call.1} parent=1 // pred_region
      %44 = dma.done [#allocation7], 8192
    $region21: #{tpu_custom_call.1} parent=1 // pred_fallthru
      _
    %v45 = vld [vmem:[#allocation3] sm:$0xff]
    %v46 = vld [vmem:[#allocation3 + $0x8] sm:$0xff]
    %v47 = vld [vmem:[#allocation3 + $0x10] sm:$0xff]
    %v48 = vld [vmem:[#allocation3 + $0x18] sm:$0xff]
    %v49 = vld [vmem:[#allocation3 + $0x20] sm:$0xff]
    %v50 = vld [vmem:[#allocation3 + $0x28] sm:$0xff]
    %v51 = vld [vmem:[#allocation3 + $0x30] sm:$0xff]
    %v52 = vld [vmem:[#allocation3 + $0x38] sm:$0xff]
    %v53 = vld [vmem:[#allocation6] sm:$0xf]
    %v54 = vld [vmem:[#allocation6 + $0x4] sm:$0xf]
    %v55 = vld [vmem:[#allocation6 + $0x8] sm:$0xf]
    %v56 = vld [vmem:[#allocation6 + $0xc] sm:$0xf]
    %v57 = vld [vmem:[#allocation6 + $0x10] sm:$0xf]
    %v58 = vld [vmem:[#allocation6 + $0x14] sm:$0xf]
    %v59 = vld [vmem:[#allocation6 + $0x18] sm:$0xf]
    %v60 = vld [vmem:[#allocation6 + $0x1c] sm:$0xf]
    %v61 = vld [vmem:[#allocation6 + $0x20] sm:$0xf]
    %v62 = vld [vmem:[#allocation6 + $0x24] sm:$0xf]
    %v63 = vld [vmem:[#allocation6 + $0x28] sm:$0xf]
    %v64 = vld [vmem:[#allocation6 + $0x2c] sm:$0xf]
    %v65 = vld [vmem:[#allocation6 + $0x30] sm:$0xf]
    %v66 = vld [vmem:[#allocation6 + $0x34] sm:$0xf]
    %v67 = vld [vmem:[#allocation6 + $0x38] sm:$0xf]
    %v68 = vld [vmem:[#allocation6 + $0x3c] sm:$0xf]
    %v69 = vld [vmem:[#allocation6 + $0x40] sm:$0xf]
    %v70 = vld [vmem:[#allocation6 + $0x44] sm:$0xf]
    %v71 = vld [vmem:[#allocation6 + $0x48] sm:$0xf]
    %v72 = vld [vmem:[#allocation6 + $0x4c] sm:$0xf]
    %v73 = vld [vmem:[#allocation6 + $0x50] sm:$0xf]
    %v74 = vld [vmem:[#allocation6 + $0x54] sm:$0xf]
    %v75 = vld [vmem:[#allocation6 + $0x58] sm:$0xf]
    %v76 = vld [vmem:[#allocation6 + $0x5c] sm:$0xf]
    %v77 = vld [vmem:[#allocation6 + $0x60] sm:$0xf]
    %v78 = vld [vmem:[#allocation6 + $0x64] sm:$0xf]
    %v79 = vld [vmem:[#allocation6 + $0x68] sm:$0xf]
    %v80 = vld [vmem:[#allocation6 + $0x6c] sm:$0xf]
    %v81 = vld [vmem:[#allocation6 + $0x70] sm:$0xf]
    %v82 = vld [vmem:[#allocation6 + $0x74] sm:$0xf]
    %v83 = vld [vmem:[#allocation6 + $0x78] sm:$0xf]
    %v84 = vld [vmem:[#allocation6 + $0x7c] sm:$0xf]
    %v85 = vld [vmem:[#allocation6 + $0x80] sm:$0xf]
    %v86 = vld [vmem:[#allocation6 + $0x84] sm:$0xf]
    %v87 = vld [vmem:[#allocation6 + $0x88] sm:$0xf]
    %v88 = vld [vmem:[#allocation6 + $0x8c] sm:$0xf]
    %v89 = vld [vmem:[#allocation6 + $0x90] sm:$0xf]
    %v90 = vld [vmem:[#allocation6 + $0x94] sm:$0xf]
    %v91 = vld [vmem:[#allocation6 + $0x98] sm:$0xf]
    %v92 = vld [vmem:[#allocation6 + $0x9c] sm:$0xf]
    %v93 = vld [vmem:[#allocation6 + $0xa0] sm:$0xf]
    %v94 = vld [vmem:[#allocation6 + $0xa4] sm:$0xf]
    %v95 = vld [vmem:[#allocation6 + $0xa8] sm:$0xf]
    %v96 = vld [vmem:[#allocation6 + $0xac] sm:$0xf]
    %v97 = vld [vmem:[#allocation6 + $0xb0] sm:$0xf]
    %v98 = vld [vmem:[#allocation6 + $0xb4] sm:$0xf]
    %v99 = vld [vmem:[#allocation6 + $0xb8] sm:$0xf]
    %v100 = vld [vmem:[#allocation6 + $0xbc] sm:$0xf]
    %v101 = vld [vmem:[#allocation6 + $0xc0] sm:$0xf]
    %v102 = vld [vmem:[#allocation6 + $0xc4] sm:$0xf]
    %v103 = vld [vmem:[#allocation6 + $0xc8] sm:$0xf]
    %v104 = vld [vmem:[#allocation6 + $0xcc] sm:$0xf]
    %v105 = vld [vmem:[#allocation6 + $0xd0] sm:$0xf]
    %v106 = vld [vmem:[#allocation6 + $0xd4] sm:$0xf]
    %v107 = vld [vmem:[#allocation6 + $0xd8] sm:$0xf]
    %v108 = vld [vmem:[#allocation6 + $0xdc] sm:$0xf]
    %v109 = vld [vmem:[#allocation6 + $0xe0] sm:$0xf]
    %v110 = vld [vmem:[#allocation6 + $0xe4] sm:$0xf]
    %v111 = vld [vmem:[#allocation6 + $0xe8] sm:$0xf]
    %v112 = vld [vmem:[#allocation6 + $0xec] sm:$0xf]
    %v113 = vld [vmem:[#allocation6 + $0xf0] sm:$0xf]
    %v114 = vld [vmem:[#allocation6 + $0xf4] sm:$0xf]
    %v115 = vld [vmem:[#allocation6 + $0xf8] sm:$0xf]
    %v116 = vld [vmem:[#allocation6 + $0xfc] sm:$0xf]
    %v117 = vld [vmem:[#allocation6 + $0x100] sm:$0xf]
    %v118 = vld [vmem:[#allocation6 + $0x104] sm:$0xf]
    %v119 = vld [vmem:[#allocation6 + $0x108] sm:$0xf]
    %v120 = vld [vmem:[#allocation6 + $0x10c] sm:$0xf]
    %v121 = vld [vmem:[#allocation6 + $0x110] sm:$0xf]
    %v122 = vld [vmem:[#allocation6 + $0x114] sm:$0xf]
    %v123 = vld [vmem:[#allocation6 + $0x118] sm:$0xf]
    %v124 = vld [vmem:[#allocation6 + $0x11c] sm:$0xf]
    %v125 = vld [vmem:[#allocation6 + $0x120] sm:$0xf]
    %v126 = vld [vmem:[#allocation6 + $0x124] sm:$0xf]
    %v127 = vld [vmem:[#allocation6 + $0x128] sm:$0xf]
    %v128 = vld [vmem:[#allocation6 + $0x12c] sm:$0xf]
    %v129 = vld [vmem:[#allocation6 + $0x130] sm:$0xf]
    %v130 = vld [vmem:[#allocation6 + $0x134] sm:$0xf]
    %v131 = vld [vmem:[#allocation6 + $0x138] sm:$0xf]
    %v132 = vld [vmem:[#allocation6 + $0x13c] sm:$0xf]
    %v133 = vld [vmem:[#allocation6 + $0x140] sm:$0xf]
    %v134 = vld [vmem:[#allocation6 + $0x144] sm:$0xf]
    %v135 = vld [vmem:[#allocation6 + $0x148] sm:$0xf]
    %v136 = vld [vmem:[#allocation6 + $0x14c] sm:$0xf]
    %v137 = vld [vmem:[#allocation6 + $0x150] sm:$0xf]
    %v138 = vld [vmem:[#allocation6 + $0x154] sm:$0xf]
    %v139 = vld [vmem:[#allocation6 + $0x158] sm:$0xf]
    %v140 = vld [vmem:[#allocation6 + $0x15c] sm:$0xf]
    %v141 = vld [vmem:[#allocation6 + $0x160] sm:$0xf]
    %v142 = vld [vmem:[#allocation6 + $0x164] sm:$0xf]
    %v143 = vld [vmem:[#allocation6 + $0x168] sm:$0xf]
    %v144 = vld [vmem:[#allocation6 + $0x16c] sm:$0xf]
    %v145 = vld [vmem:[#allocation6 + $0x170] sm:$0xf]
    %v146 = vld [vmem:[#allocation6 + $0x174] sm:$0xf]
    %v147 = vld [vmem:[#allocation6 + $0x178] sm:$0xf]
    %v148 = vld [vmem:[#allocation6 + $0x17c] sm:$0xf]
    %v149 = vld [vmem:[#allocation6 + $0x180] sm:$0xf]
    %v150 = vld [vmem:[#allocation6 + $0x184] sm:$0xf]
    %v151 = vld [vmem:[#allocation6 + $0x188] sm:$0xf]
    %v152 = vld [vmem:[#allocation6 + $0x18c] sm:$0xf]
    %v153 = vld [vmem:[#allocation6 + $0x190] sm:$0xf]
    %v154 = vld [vmem:[#allocation6 + $0x194] sm:$0xf]
    %v155 = vld [vmem:[#allocation6 + $0x198] sm:$0xf]
    %v156 = vld [vmem:[#allocation6 + $0x19c] sm:$0xf]
    %v157 = vld [vmem:[#allocation6 + $0x1a0] sm:$0xf]
    %v158 = vld [vmem:[#allocation6 + $0x1a4] sm:$0xf]
    %v159 = vld [vmem:[#allocation6 + $0x1a8] sm:$0xf]
    %v160 = vld [vmem:[#allocation6 + $0x1ac] sm:$0xf]
    %v161 = vld [vmem:[#allocation6 + $0x1b0] sm:$0xf]
    %v162 = vld [vmem:[#allocation6 + $0x1b4] sm:$0xf]
    %v163 = vld [vmem:[#allocation6 + $0x1b8] sm:$0xf]
    %v164 = vld [vmem:[#allocation6 + $0x1bc] sm:$0xf]
    %v165 = vld [vmem:[#allocation6 + $0x1c0] sm:$0xf]
    %v166 = vld [vmem:[#allocation6 + $0x1c4] sm:$0xf]
    %v167 = vld [vmem:[#allocation6 + $0x1c8] sm:$0xf]
    %v168 = vld [vmem:[#allocation6 + $0x1cc] sm:$0xf]
    %v169 = vld [vmem:[#allocation6 + $0x1d0] sm:$0xf]
    %v170 = vld [vmem:[#allocation6 + $0x1d4] sm:$0xf]
    %v171 = vld [vmem:[#allocation6 + $0x1d8] sm:$0xf]
    %v172 = vld [vmem:[#allocation6 + $0x1dc] sm:$0xf]
    %v173 = vld [vmem:[#allocation6 + $0x1e0] sm:$0xf]
    %v174 = vld [vmem:[#allocation6 + $0x1e4] sm:$0xf]
    %v175 = vld [vmem:[#allocation6 + $0x1e8] sm:$0xf]
    %v176 = vld [vmem:[#allocation6 + $0x1ec] sm:$0xf]
    %v177 = vld [vmem:[#allocation6 + $0x1f0] sm:$0xf]
    %v178 = vld [vmem:[#allocation6 + $0x1f4] sm:$0xf]
    %v179 = vld [vmem:[#allocation6 + $0x1f8] sm:$0xf]
    %v180 = vld [vmem:[#allocation6 + $0x1fc] sm:$0xf]
    %v181 = vpack.c.bf16 %v45, %v45
    %v182 = vpack.c.bf16 %v46, %v46
    %v183 = vpack.c.bf16 %v47, %v47
    %v184 = vpack.c.bf16 %v48, %v48
    %v185 = vpack.c.bf16 %v49, %v49
    %v186 = vpack.c.bf16 %v50, %v50
    %v187 = vpack.c.bf16 %v51, %v51
    %v188 = vpack.c.bf16 %v52, %v52
    %v317 = vunpack.c.l.b16 %v53
    %v318 = vunpack.c.l.b16 %v54
    %v319 = vunpack.c.l.b16 %v55
    %v320 = vunpack.c.l.b16 %v56
    %v321 = vunpack.c.l.b16 %v57
    %v322 = vunpack.c.l.b16 %v58
    %v323 = vunpack.c.l.b16 %v59
    %v324 = vunpack.c.l.b16 %v60
    %v325 = vunpack.c.l.b16 %v61
    %v326 = vunpack.c.l.b16 %v62
    %v327 = vunpack.c.l.b16 %v63
    %v328 = vunpack.c.l.b16 %v64
    %v329 = vunpack.c.l.b16 %v65
    %v330 = vunpack.c.l.b16 %v66
    %v331 = vunpack.c.l.b16 %v67
    %v332 = vunpack.c.l.b16 %v68
    %v333 = vunpack.c.l.b16 %v69
    %v334 = vunpack.c.l.b16 %v70
    %v335 = vunpack.c.l.b16 %v71
    %v336 = vunpack.c.l.b16 %v72
    %v337 = vunpack.c.l.b16 %v73
    %v338 = vunpack.c.l.b16 %v74
    %v339 = vunpack.c.l.b16 %v75
    %v340 = vunpack.c.l.b16 %v76
    %v341 = vunpack.c.l.b16 %v77
    %v342 = vunpack.c.l.b16 %v78
    %v343 = vunpack.c.l.b16 %v79
    %v344 = vunpack.c.l.b16 %v80
    %v345 = vunpack.c.l.b16 %v81
    %v346 = vunpack.c.l.b16 %v82
    %v347 = vunpack.c.l.b16 %v83
    %v348 = vunpack.c.l.b16 %v84
    %v349 = vunpack.c.l.b16 %v85
    %v350 = vunpack.c.l.b16 %v86
    %v351 = vunpack.c.l.b16 %v87
    %v352 = vunpack.c.l.b16 %v88
    %v353 = vunpack.c.l.b16 %v89
    %v354 = vunpack.c.l.b16 %v90
    %v355 = vunpack.c.l.b16 %v91
    %v356 = vunpack.c.l.b16 %v92
    %v357 = vunpack.c.l.b16 %v93
    %v358 = vunpack.c.l.b16 %v94
    %v359 = vunpack.c.l.b16 %v95
    %v360 = vunpack.c.l.b16 %v96
    %v361 = vunpack.c.l.b16 %v97
    %v362 = vunpack.c.l.b16 %v98
    %v363 = vunpack.c.l.b16 %v99
    %v364 = vunpack.c.l.b16 %v100
    %v365 = vunpack.c.l.b16 %v101
    %v366 = vunpack.c.l.b16 %v102
    %v367 = vunpack.c.l.b16 %v103
    %v368 = vunpack.c.l.b16 %v104
    %v369 = vunpack.c.l.b16 %v105
    %v370 = vunpack.c.l.b16 %v106
    %v371 = vunpack.c.l.b16 %v107
    %v372 = vunpack.c.l.b16 %v108
    %v373 = vunpack.c.l.b16 %v109
    %v374 = vunpack.c.l.b16 %v110
    %v375 = vunpack.c.l.b16 %v111
    %v376 = vunpack.c.l.b16 %v112
    %v377 = vunpack.c.l.b16 %v113
    %v378 = vunpack.c.l.b16 %v114
    %v379 = vunpack.c.l.b16 %v115
    %v380 = vunpack.c.l.b16 %v116
    %v381 = vunpack.c.l.b16 %v117
    %v382 = vunpack.c.l.b16 %v118
    %v383 = vunpack.c.l.b16 %v119
    %v384 = vunpack.c.l.b16 %v120
    %v385 = vunpack.c.l.b16 %v121
    %v386 = vunpack.c.l.b16 %v122
    %v387 = vunpack.c.l.b16 %v123
    %v388 = vunpack.c.l.b16 %v124
    %v389 = vunpack.c.l.b16 %v125
    %v390 = vunpack.c.l.b16 %v126
    %v391 = vunpack.c.l.b16 %v127
    %v392 = vunpack.c.l.b16 %v128
    %v393 = vunpack.c.l.b16 %v129
    %v394 = vunpack.c.l.b16 %v130
    %v395 = vunpack.c.l.b16 %v131
    %v396 = vunpack.c.l.b16 %v132
    %v397 = vunpack.c.l.b16 %v133
    %v398 = vunpack.c.l.b16 %v134
    %v399 = vunpack.c.l.b16 %v135
    %v400 = vunpack.c.l.b16 %v136
    %v401 = vunpack.c.l.b16 %v137
    %v402 = vunpack.c.l.b16 %v138
    %v403 = vunpack.c.l.b16 %v139
    %v404 = vunpack.c.l.b16 %v140
    %v405 = vunpack.c.l.b16 %v141
    %v406 = vunpack.c.l.b16 %v142
    %v407 = vunpack.c.l.b16 %v143
    %v408 = vunpack.c.l.b16 %v144
    %v409 = vunpack.c.l.b16 %v145
    %v410 = vunpack.c.l.b16 %v146
    %v411 = vunpack.c.l.b16 %v147
    %v412 = vunpack.c.l.b16 %v148
    %v413 = vunpack.c.l.b16 %v149
    %v414 = vunpack.c.l.b16 %v150
    %v415 = vunpack.c.l.b16 %v151
    %v416 = vunpack.c.l.b16 %v152
    %v417 = vunpack.c.l.b16 %v153
    %v418 = vunpack.c.l.b16 %v154
    %v419 = vunpack.c.l.b16 %v155
    %v420 = vunpack.c.l.b16 %v156
    %v421 = vunpack.c.l.b16 %v157
    %v422 = vunpack.c.l.b16 %v158
    %v423 = vunpack.c.l.b16 %v159
    %v424 = vunpack.c.l.b16 %v160
    %v425 = vunpack.c.l.b16 %v161
    %v426 = vunpack.c.l.b16 %v162
    %v427 = vunpack.c.l.b16 %v163
    %v428 = vunpack.c.l.b16 %v164
    %v429 = vunpack.c.l.b16 %v165
    %v430 = vunpack.c.l.b16 %v166
    %v431 = vunpack.c.l.b16 %v167
    %v432 = vunpack.c.l.b16 %v168
    %v433 = vunpack.c.l.b16 %v169
    %v434 = vunpack.c.l.b16 %v170
    %v435 = vunpack.c.l.b16 %v171
    %v436 = vunpack.c.l.b16 %v172
    %v437 = vunpack.c.l.b16 %v173
    %v438 = vunpack.c.l.b16 %v174
    %v439 = vunpack.c.l.b16 %v175
    %v440 = vunpack.c.l.b16 %v176
    %v441 = vunpack.c.l.b16 %v177
    %v442 = vunpack.c.l.b16 %v178
    %v443 = vunpack.c.l.b16 %v179
    %v444 = vunpack.c.l.b16 %v180
    %v445 = vpack.c.b16 %v318, %v317
    %v446 = vpack.c.b16 %v320, %v319
    %v447 = vpack.c.b16 %v322, %v321
    %v448 = vpack.c.b16 %v324, %v323
    %v449 = vpack.c.b16 %v326, %v325
    %v450 = vpack.c.b16 %v328, %v327
    %v451 = vpack.c.b16 %v330, %v329
    %v452 = vpack.c.b16 %v332, %v331
    %v453 = vpack.c.b16 %v334, %v333
    %v454 = vpack.c.b16 %v336, %v335
    %v455 = vpack.c.b16 %v338, %v337
    %v456 = vpack.c.b16 %v340, %v339
    %v457 = vpack.c.b16 %v342, %v341
    %v458 = vpack.c.b16 %v344, %v343
    %v459 = vpack.c.b16 %v346, %v345
    %v460 = vpack.c.b16 %v348, %v347
    %v461 = vpack.c.b16 %v350, %v349
    %v462 = vpack.c.b16 %v352, %v351
    %v463 = vpack.c.b16 %v354, %v353
    %v464 = vpack.c.b16 %v356, %v355
    %v465 = vpack.c.b16 %v358, %v357
    %v466 = vpack.c.b16 %v360, %v359
    %v467 = vpack.c.b16 %v362, %v361
    %v468 = vpack.c.b16 %v364, %v363
    %v469 = vpack.c.b16 %v366, %v365
    %v470 = vpack.c.b16 %v368, %v367
    %v471 = vpack.c.b16 %v370, %v369
    %v472 = vpack.c.b16 %v372, %v371
    %v473 = vpack.c.b16 %v374, %v373
    %v474 = vpack.c.b16 %v376, %v375
    %v475 = vpack.c.b16 %v378, %v377
    %v476 = vpack.c.b16 %v380, %v379
    %v477 = vpack.c.b16 %v382, %v381
    %v478 = vpack.c.b16 %v384, %v383
    %v479 = vpack.c.b16 %v386, %v385
    %v480 = vpack.c.b16 %v388, %v387
    %v481 = vpack.c.b16 %v390, %v389
    %v482 = vpack.c.b16 %v392, %v391
    %v483 = vpack.c.b16 %v394, %v393
    %v484 = vpack.c.b16 %v396, %v395
    %v485 = vpack.c.b16 %v398, %v397
    %v486 = vpack.c.b16 %v400, %v399
    %v487 = vpack.c.b16 %v402, %v401
    %v488 = vpack.c.b16 %v404, %v403
    %v489 = vpack.c.b16 %v406, %v405
    %v490 = vpack.c.b16 %v408, %v407
    %v491 = vpack.c.b16 %v410, %v409
    %v492 = vpack.c.b16 %v412, %v411
    %v493 = vpack.c.b16 %v414, %v413
    %v494 = vpack.c.b16 %v416, %v415
    %v495 = vpack.c.b16 %v418, %v417
    %v496 = vpack.c.b16 %v420, %v419
    %v497 = vpack.c.b16 %v422, %v421
    %v498 = vpack.c.b16 %v424, %v423
    %v499 = vpack.c.b16 %v426, %v425
    %v500 = vpack.c.b16 %v428, %v427
    %v501 = vpack.c.b16 %v430, %v429
    %v502 = vpack.c.b16 %v432, %v431
    %v503 = vpack.c.b16 %v434, %v433
    %v504 = vpack.c.b16 %v436, %v435
    %v505 = vpack.c.b16 %v438, %v437
    %v506 = vpack.c.b16 %v440, %v439
    %v507 = vpack.c.b16 %v442, %v441
    %v508 = vpack.c.b16 %v444, %v443
    %573 = vmatpush.bf16.msra.mxu0 %v452
    %574 = vmatpush.bf16.msra.mxu0 %v451
    %575 = vmatpush.bf16.msra.mxu0 %v450
    %576 = vmatpush.bf16.msra.mxu0 %v449
    %577 = vmatpush.bf16.msra.mxu0 %v448
    %578 = vmatpush.bf16.msra.mxu0 %v447
    %579 = vmatpush.bf16.msra.mxu0 %v446
    %580 = vmatpush.bf16.msra.mxu0 %v445
    %581 = vmatmul.bf16.gmra.mxu0 %v181
    %v582 = vpop.f32.mrf.mxu0
    %v583 = vadd.f32 0.0, %v582
    %v584 = vpop.f32.mrf.mxu0
    %585 = vdwg.mxu0
    %586 = vmatpush.bf16.msra.mxu0 %v460
    %587 = vmatpush.bf16.msra.mxu0 %v459
    %588 = vmatpush.bf16.msra.mxu0 %v458
    %589 = vmatpush.bf16.msra.mxu0 %v457
    %590 = vmatpush.bf16.msra.mxu0 %v456
    %591 = vmatpush.bf16.msra.mxu0 %v455
    %592 = vmatpush.bf16.msra.mxu0 %v454
    %593 = vmatpush.bf16.msra.mxu0 %v453
    %594 = vmatmul.bf16.gmra.mxu0 %v182
    %v595 = vpop.f32.mrf.mxu0
    %v596 = vadd.f32 %v583, %v595
    %v597 = vpop.f32.mrf.mxu0
    %598 = vdwg.mxu0
    %599 = vmatpush.bf16.msra.mxu0 %v468
    %600 = vmatpush.bf16.msra.mxu0 %v467
    %601 = vmatpush.bf16.msra.mxu0 %v466
    %602 = vmatpush.bf16.msra.mxu0 %v465
    %603 = vmatpush.bf16.msra.mxu0 %v464
    %604 = vmatpush.bf16.msra.mxu0 %v463
    %605 = vmatpush.bf16.msra.mxu0 %v462
    %606 = vmatpush.bf16.msra.mxu0 %v461
    %607 = vmatmul.bf16.gmra.mxu0 %v183
    %v608 = vpop.f32.mrf.mxu0
    %v609 = vadd.f32 %v596, %v608
    %v610 = vpop.f32.mrf.mxu0
    %611 = vdwg.mxu0
    %612 = vmatpush.bf16.msra.mxu0 %v476
    %613 = vmatpush.bf16.msra.mxu0 %v475
    %614 = vmatpush.bf16.msra.mxu0 %v474
    %615 = vmatpush.bf16.msra.mxu0 %v473
    %616 = vmatpush.bf16.msra.mxu0 %v472
    %617 = vmatpush.bf16.msra.mxu0 %v471
    %618 = vmatpush.bf16.msra.mxu0 %v470
    %619 = vmatpush.bf16.msra.mxu0 %v469
    %620 = vmatmul.bf16.gmra.mxu0 %v184
    %v621 = vpop.f32.mrf.mxu0
    %v622 = vadd.f32 %v609, %v621
    %v623 = vpop.f32.mrf.mxu0
    %624 = vdwg.mxu0
    %625 = vmatpush.bf16.msra.mxu0 %v484
    %626 = vmatpush.bf16.msra.mxu0 %v483
    %627 = vmatpush.bf16.msra.mxu0 %v482
    %628 = vmatpush.bf16.msra.mxu0 %v481
    %629 = vmatpush.bf16.msra.mxu0 %v480
    %630 = vmatpush.bf16.msra.mxu0 %v479
    %631 = vmatpush.bf16.msra.mxu0 %v478
    %632 = vmatpush.bf16.msra.mxu0 %v477
    %633 = vmatmul.bf16.gmra.mxu0 %v185
    %v634 = vpop.f32.mrf.mxu0
    %v635 = vadd.f32 %v622, %v634
    %v636 = vpop.f32.mrf.mxu0
    %637 = vdwg.mxu0
    %638 = vmatpush.bf16.msra.mxu0 %v492
    %639 = vmatpush.bf16.msra.mxu0 %v491
    %640 = vmatpush.bf16.msra.mxu0 %v490
    %641 = vmatpush.bf16.msra.mxu0 %v489
    %642 = vmatpush.bf16.msra.mxu0 %v488
    %643 = vmatpush.bf16.msra.mxu0 %v487
    %644 = vmatpush.bf16.msra.mxu0 %v486
    %645 = vmatpush.bf16.msra.mxu0 %v485
    %646 = vmatmul.bf16.gmra.mxu0 %v186
    %v647 = vpop.f32.mrf.mxu0
    %v648 = vadd.f32 %v635, %v647
    %v649 = vpop.f32.mrf.mxu0
    %650 = vdwg.mxu0
    %651 = vmatpush.bf16.msra.mxu0 %v500
    %652 = vmatpush.bf16.msra.mxu0 %v499
    %653 = vmatpush.bf16.msra.mxu0 %v498
    %654 = vmatpush.bf16.msra.mxu0 %v497
    %655 = vmatpush.bf16.msra.mxu0 %v496
    %656 = vmatpush.bf16.msra.mxu0 %v495
    %657 = vmatpush.bf16.msra.mxu0 %v494
    %658 = vmatpush.bf16.msra.mxu0 %v493
    %659 = vmatmul.bf16.gmra.mxu0 %v187
    %v660 = vpop.f32.mrf.mxu0
    %v661 = vadd.f32 %v648, %v660
    %v662 = vpop.f32.mrf.mxu0
    %663 = vdwg.mxu0
    %664 = vmatpush.bf16.msra.mxu0 %v508
    %665 = vmatpush.bf16.msra.mxu0 %v507
    %666 = vmatpush.bf16.msra.mxu0 %v506
    %667 = vmatpush.bf16.msra.mxu0 %v505
    %668 = vmatpush.bf16.msra.mxu0 %v504
    %669 = vmatpush.bf16.msra.mxu0 %v503
    %670 = vmatpush.bf16.msra.mxu0 %v502
    %671 = vmatpush.bf16.msra.mxu0 %v501
    %672 = vmatmul.bf16.gmra.mxu0 %v188
    %v673 = vpop.f32.mrf.mxu0
    %v674 = vadd.f32 %v661, %v673
    %v675 = vpop.f32.mrf.mxu0
    %676 = vdwg.mxu0
    %p677 = scmp.eq.s32.totalorder 0, 0
    // Predicated region
    $region22: #{tpu_custom_call.1} parent=1 // pred_check
      %p678 = pneg %p677
    $region23: #{tpu_custom_call.1} parent=1 // pred_check_branch
      %680 = sbr.rel (%p678) target = $region25
    $region24: #{tpu_custom_call.1} parent=1 // pred_region
      %681 = vst [vmem:[#allocation2] sm:$0xff] %v674
    $region25: #{tpu_custom_call.1} parent=1 // pred_fallthru
      _
    %p682 = scmp.gt.s32.totalorder 0, 0
    // Predicated region
    $region26: #{tpu_custom_call.1} parent=1 // pred_check
      %p683 = pneg %p682
    $region27: #{tpu_custom_call.1} parent=1 // pred_check_branch
      %685 = sbr.rel (%p683) target = $region29
    $region28: #{tpu_custom_call.1} parent=1 // pred_region
      %v686 = vld [vmem:[#allocation2] sm:$0xff]
      %v687 = vadd.f32 %v686, %v674
      %688 = vst [vmem:[#allocation2] sm:$0xff] %v687
    $region29: #{tpu_custom_call.1} parent=1 // pred_fallthru
      _
    // Predicated region
    $region30: #{tpu_custom_call.1} parent=1 // pred_check
      %p689 = pneg %p677
    $region31: #{tpu_custom_call.1} parent=1 // pred_check_branch
      %691 = sbr.rel (%p689) target = $region33
    $region32: #{tpu_custom_call.1} parent=1 // pred_region
      %v692 = vld [vmem:[#allocation2] sm:$0xff]
      %v693 = vld [vmem:[%s2] sm:$0x1]
      %v695 = vperm.slane %v693, 0
      %v697 = vadd.f32 %v692, %v695
      %698 = vst [vmem:[#allocation8] sm:$0xff] %v697
    $region33: #{tpu_custom_call.1} parent=1 // pred_fallthru
      _
    // Predicated region
    $region34: #{tpu_custom_call.1} parent=1 // pred_check
      _
    $region35: #{tpu_custom_call.1} parent=1 // pred_check_branch
      %700 = sbr.rel (0) target = $region37
    $region36: #{tpu_custom_call.1} parent=1 // pred_region
      %702 = vsyncadd [#allocation5], 0
      %s704 = sshll.u32 [#allocation8], 4
      %s705 = int_to_ptr.vmem [resolvable:$true] %s704
      %s706 = sshll.u32 %s3, 4
      %s707 = int_to_ptr.hbm [resolvable:$true] %s706
      %709 = dma.vmem_to_hbm [thread:$0]  %s705, 128, %s707, [#allocation5]
    $region37: #{tpu_custom_call.1} parent=1 // pred_fallthru
      _
    // Predicated region
    $region38: #{tpu_custom_call.1} parent=1 // pred_check
      _
    $region39: #{tpu_custom_call.1} parent=1 // pred_check_branch
      %711 = sbr.rel (0) target = $region41
    $region40: #{tpu_custom_call.1} parent=1 // pred_region
      %713 = dma.done [#allocation5], 128
    $region41: #{tpu_custom_call.1} parent=1 // pred_fallthru
      _
    %714 = vsyncpa [#allocation4], 1
    %715 = vsyncpa [#allocation7], 1
    %716 = vsyncpa [#allocation5], 1

</llo_original>
